<compile_context>
chip_gen: v5e
topology: v5e:2x2
jax: 0.10.0
libtpu: 0.0.40
codegen_flags: <defaults>
</compile_context>

<pallas_src>
import functools

import jax
import jax.numpy as jnp
from jax.experimental import pallas as pl
from jax.experimental.pallas import tpu as pltpu

_LANES = 128


def _masked_mse_kernel(pred_ref, tgt_ref, sum_ref, cnt_ref, *,
                       rows, block_rows, tiles_per_split):
    c = pl.program_id(0)          # split index ("parallel", per-TensorCore)
    i = pl.program_id(1)          # tile index within this split ("arbitrary")

    @pl.when(i == 0)
    def _():
        sum_ref[...] = jnp.zeros_like(sum_ref)
        cnt_ref[...] = jnp.zeros_like(cnt_ref)

    t = tgt_ref[...].astype(jnp.float32)
    p = pred_ref[...].astype(jnp.float32)

    # Logical tile index (may exceed the number of real tiles for the last
    # split; the row mask below then zeroes that tile's entire contribution).
    tile = c * tiles_per_split + i
    row_in_tile = jax.lax.broadcasted_iota(jnp.int32, (block_rows, _LANES), 0)
    global_row = tile * block_rows + row_in_tile
    valid = (global_row < rows) & (t > 0.0)

    d = jnp.where(valid, t - p, 0.0)
    sq = d * d
    ones = valid.astype(jnp.float32)

    # Fold the (block_rows, 128) tile into a single vreg-shaped (8, 128)
    # partial accumulator: pure VPU adds, no per-step cross-lane XLU work.
    sum_ref[...] += sq.reshape(block_rows // 8, 8, _LANES).sum(
        axis=0, keepdims=True)
    cnt_ref[...] += ones.reshape(block_rows // 8, 8, _LANES).sum(
        axis=0, keepdims=True)


@functools.partial(jax.jit, static_argnames=("block_rows", "num_splits"))
def masked_mse_loss(pred, target, *, block_rows=2048, num_splits=2):
    assert pred.ndim == target.ndim, "MSE_Loss: inconsistent dimensions"

    n = pred.size
    pred_f = pred.reshape(-1)
    tgt_f = target.reshape(-1)

    pad = (-n) % _LANES
    if pad:
        # Rare fallback (numel not a multiple of 128): pad only the tail.
        # Padded target values are 0 and therefore excluded by `target > 0`.
        pred_f = jnp.pad(pred_f, (0, pad))
        tgt_f = jnp.pad(tgt_f, (0, pad))
    rows = (n + pad) // _LANES

    max_rows = ((rows + 7) // 8) * 8
    block_rows = min(block_rows, max_rows)
    block_rows = max(8, (block_rows // 8) * 8)

    total_tiles = pl.cdiv(rows, block_rows)
    num_splits = max(1, min(num_splits, total_tiles))
    tps = pl.cdiv(total_tiles, num_splits)

    pred_2d = pred_f.reshape(rows, _LANES)
    tgt_2d = tgt_f.reshape(rows, _LANES)

    if num_splits * tps == total_tiles:
        def in_map(c, i):
            return (c * tps + i, 0)
    else:
        # Last split has fewer real tiles: clamp the block index; the in-kernel
        # row mask zeroes the duplicated block's contribution.
        def in_map(c, i):
            return (jnp.minimum(c * tps + i, total_tiles - 1), 0)

    kernel = functools.partial(_masked_mse_kernel, rows=rows,
                               block_rows=block_rows, tiles_per_split=tps)

    out_sum, out_cnt = pl.pallas_call(
        kernel,
        out_shape=(
            jax.ShapeDtypeStruct((num_splits, 8, _LANES), jnp.float32),
            jax.ShapeDtypeStruct((num_splits, 8, _LANES), jnp.float32),
        ),
        grid_spec=pltpu.PrefetchScalarGridSpec(
            num_scalar_prefetch=0,
            grid=(num_splits, tps),
            in_specs=[
                pl.BlockSpec((block_rows, _LANES), in_map),
                pl.BlockSpec((block_rows, _LANES), in_map),
            ],
            out_specs=(
                pl.BlockSpec((1, 8, _LANES), lambda c, i: (c, 0, 0)),
                pl.BlockSpec((1, 8, _LANES), lambda c, i: (c, 0, 0)),
            ),
        ),
        compiler_params=pltpu.CompilerParams(
            dimension_semantics=("parallel", "arbitrary")),
    )(pred_2d, tgt_2d)

    # Tiny final reduction + divide in XLA (NaN if no valid element, matching
    # PyTorch's mean over an empty selection).
    return jnp.sum(out_sum) / jnp.sum(out_cnt)


def _reference(pred, target):
    t = target.astype(jnp.float32)
    p = pred.astype(jnp.float32)
    mask = t > 0
    diff = jnp.where(mask, t - p, 0.0)
    return jnp.sum(diff * diff) / jnp.sum(mask.astype(jnp.float32))


if __name__ == "__main__":
    key = jax.random.PRNGKey(0)
    k1, k2, k3, k4 = jax.random.split(key, 4)

    # NCHW f32 input; target ~ N(0,1) so the mask is non-trivial.
    shape = (2, 4, 16, 16)
    pred = jax.random.normal(k1, shape, dtype=jnp.float32)
    target = jax.random.normal(k2, shape, dtype=jnp.float32)
    loss = masked_mse_loss(pred, target)
    jax.block_until_ready(loss)
    ref = _reference(pred, target)
    assert jnp.allclose(loss, ref, rtol=1e-4, atol=1e-6), (loss, ref)

    # Odd-sized bf16 input: exercises narrow-dtype streaming, the tail pad,
    # a partial last tile and the clamped multi-split path
    # (rows=33, block_rows=8 -> 5 tiles over 2 splits).
    shape2 = (2, 3, 37, 19)
    pred2 = jax.random.normal(k3, shape2, dtype=jnp.bfloat16)
    target2 = jax.random.normal(k4, shape2, dtype=jnp.bfloat16)
    loss2 = masked_mse_loss(pred2, target2, block_rows=8, num_splits=2)
    jax.block_until_ready(loss2)
    ref2 = _reference(pred2, target2)
    assert jnp.allclose(loss2, ref2, rtol=1e-4, atol=1e-6), (loss2, ref2)

    print("KERNEL_OK")
</pallas_src>

<mosaic_0001>
module attributes {stable_mosaic.version = 11 : i64} {
  func.func @_masked_mse_kernel(%arg0: i32, %arg1: i32, %arg2: memref<16x128xf32, #tpu.memory_space<vmem>>, %arg3: memref<16x128xf32, #tpu.memory_space<vmem>>, %arg4: memref<1x8x128xf32, #tpu.memory_space<vmem>>, %arg5: memref<1x8x128xf32, #tpu.memory_space<vmem>>) attributes {dimension_semantics = [#tpu.dimension_semantics<parallel>, #tpu.dimension_semantics<arbitrary>], iteration_bounds = array<i64: 1, 1>, scalar_prefetch = 0 : i64, scratch_operands = 0 : i64, tpu.core_type = #tpu.core_type<tc>, window_params = [{transform_indices = @transform_0, window_bounds = array<i64: 16, 128>}, {transform_indices = @transform_1, window_bounds = array<i64: 16, 128>}, {transform_indices = @transform_2, window_bounds = array<i64: 1, 8, 128>}, {transform_indices = @transform_3, window_bounds = array<i64: 1, 8, 128>}]} {
    %c0_i32 = arith.constant 0 : i32
    %0 = arith.cmpi eq, %arg1, %c0_i32 : i32
    %1 = arith.extui %0 : i1 to i32
    %c0_i32_0 = arith.constant 0 : i32
    %2 = arith.cmpi ne, %1, %c0_i32_0 : i32
    scf.if %2 {
      %cst_20 = arith.constant 0.000000e+00 : f32
      %34 = vector.broadcast %cst_20 : f32 to vector<1x8x128xf32>
      %c0_21 = arith.constant 0 : index
      %c0_22 = arith.constant 0 : index
      %c0_23 = arith.constant 0 : index
      %35 = vector.load %arg4[%c0_21, %c0_22, %c0_23] : memref<1x8x128xf32, #tpu.memory_space<vmem>>, vector<1x8x128xf32>
      tpu.vector_store %arg4[%c0_21, %c0_22, %c0_23], %34 {strides = array<i32>} : memref<1x8x128xf32, #tpu.memory_space<vmem>>, vector<1x8x128xf32>,
      %cst_24 = arith.constant 0.000000e+00 : f32
      %36 = vector.broadcast %cst_24 : f32 to vector<1x8x128xf32>
      %c0_25 = arith.constant 0 : index
      %c0_26 = arith.constant 0 : index
      %c0_27 = arith.constant 0 : index
      %37 = vector.load %arg5[%c0_25, %c0_26, %c0_27] : memref<1x8x128xf32, #tpu.memory_space<vmem>>, vector<1x8x128xf32>
      tpu.vector_store %arg5[%c0_25, %c0_26, %c0_27], %36 {strides = array<i32>} : memref<1x8x128xf32, #tpu.memory_space<vmem>>, vector<1x8x128xf32>,
    } else {
    }
    %c0 = arith.constant 0 : index
    %c0_1 = arith.constant 0 : index
    %3 = vector.load %arg3[%c0, %c0_1] : memref<16x128xf32, #tpu.memory_space<vmem>>, vector<16x128xf32>
    %c0_2 = arith.constant 0 : index
    %c0_3 = arith.constant 0 : index
    %4 = vector.load %arg2[%c0_2, %c0_3] : memref<16x128xf32, #tpu.memory_space<vmem>>, vector<16x128xf32>
    %c1_i32 = arith.constant 1 : i32
    %5 = arith.muli %arg0, %c1_i32 : i32
    %6 = arith.addi %5, %arg1 : i32
    %7 = tpu.iota {dimensions = array<i32: 0>} : vector<16x128xi32>
    %c16_i32 = arith.constant 16 : i32
    %8 = arith.muli %6, %c16_i32 : i32
    %9 = vector.broadcast %8 : i32 to vector<16x128xi32>
    %10 = arith.addi %9, %7 : vector<16x128xi32>
    %c16_i32_4 = arith.constant 16 : i32
    %11 = vector.broadcast %c16_i32_4 : i32 to vector<16x128xi32>
    %12 = arith.cmpi slt, %10, %11 : vector<16x128xi32>
    %cst = arith.constant 0.000000e+00 : f32
    %13 = vector.broadcast %cst : f32 to vector<16x128xf32>
    %14 = arith.cmpf ogt, %3, %13 : vector<16x128xf32>
    %15 = arith.andi %12, %14 : vector<16x128xi1>
    %16 = arith.subf %3, %4 : vector<16x128xf32>
    %cst_5 = arith.constant 0.000000e+00 : f32
    %17 = vector.broadcast %cst_5 : f32 to vector<16x128xf32>
    %18 = arith.select %15, %16, %17 : vector<16x128xi1>, vector<16x128xf32>
    %19 = arith.mulf %18, %18 : vector<16x128xf32>
    %20 = arith.extui %15 : vector<16x128xi1> to vector<16x128xi32>
    %21 = arith.sitofp %20 : vector<16x128xi32> to vector<16x128xf32>
    %c0_6 = arith.constant 0 : index
    %c0_7 = arith.constant 0 : index
    %c0_8 = arith.constant 0 : index
    %22 = vector.load %arg4[%c0_6, %c0_7, %c0_8] : memref<1x8x128xf32, #tpu.memory_space<vmem>>, vector<1x8x128xf32>
    %23 = vector.shape_cast %19 : vector<16x128xf32> to vector<2x8x128xf32>
    %cst_9 = arith.constant dense<0.000000e+00> : vector<8x128xf32>
    %24 = vector.multi_reduction <add>, %23, %cst_9 [0] : vector<2x8x128xf32> to vector<8x128xf32>
    %25 = vector.shape_cast %24 : vector<8x128xf32> to vector<1x8x128xf32>
    %26 = arith.addf %22, %25 : vector<1x8x128xf32>
    %c0_10 = arith.constant 0 : index
    %c0_11 = arith.constant 0 : index
    %c0_12 = arith.constant 0 : index
    %27 = vector.load %arg4[%c0_10, %c0_11, %c0_12] : memref<1x8x128xf32, #tpu.memory_space<vmem>>, vector<1x8x128xf32>
    tpu.vector_store %arg4[%c0_10, %c0_11, %c0_12], %26 {strides = array<i32>} : memref<1x8x128xf32, #tpu.memory_space<vmem>>, vector<1x8x128xf32>,
    %c0_13 = arith.constant 0 : index
    %c0_14 = arith.constant 0 : index
    %c0_15 = arith.constant 0 : index
    %28 = vector.load %arg5[%c0_13, %c0_14, %c0_15] : memref<1x8x128xf32, #tpu.memory_space<vmem>>, vector<1x8x128xf32>
    %29 = vector.shape_cast %21 : vector<16x128xf32> to vector<2x8x128xf32>
    %cst_16 = arith.constant dense<0.000000e+00> : vector<8x128xf32>
    %30 = vector.multi_reduction <add>, %29, %cst_16 [0] : vector<2x8x128xf32> to vector<8x128xf32>
    %31 = vector.shape_cast %30 : vector<8x128xf32> to vector<1x8x128xf32>
    %32 = arith.addf %28, %31 : vector<1x8x128xf32>
    %c0_17 = arith.constant 0 : index
    %c0_18 = arith.constant 0 : index
    %c0_19 = arith.constant 0 : index
    %33 = vector.load %arg5[%c0_17, %c0_18, %c0_19] : memref<1x8x128xf32, #tpu.memory_space<vmem>>, vector<1x8x128xf32>
    tpu.vector_store %arg5[%c0_17, %c0_18, %c0_19], %32 {strides = array<i32>} : memref<1x8x128xf32, #tpu.memory_space<vmem>>, vector<1x8x128xf32>,
    return
  }
  func.func @transform_0(%arg0: i32, %arg1: i32) -> (i32, i32) {
    %c1_i32 = arith.constant 1 : i32
    %0 = arith.muli %arg0, %c1_i32 : i32
    %1 = arith.addi %0, %arg1 : i32
    %c0_i32 = arith.constant 0 : i32
    %c0_i32_0 = arith.constant 0 : i32
    return %1, %c0_i32 : i32, i32
  }
  func.func @transform_1(%arg0: i32, %arg1: i32) -> (i32, i32) {
    %c1_i32 = arith.constant 1 : i32
    %0 = arith.muli %arg0, %c1_i32 : i32
    %1 = arith.addi %0, %arg1 : i32
    %c0_i32 = arith.constant 0 : i32
    %c0_i32_0 = arith.constant 0 : i32
    return %1, %c0_i32 : i32, i32
  }
  func.func @transform_2(%arg0: i32, %arg1: i32) -> (i32, i32, i32) {
    %c0_i32 = arith.constant 0 : i32
    %c0_i32_0 = arith.constant 0 : i32
    %c0_i32_1 = arith.constant 0 : i32
    return %arg0, %c0_i32, %c0_i32_0 : i32, i32, i32
  }
  func.func @transform_3(%arg0: i32, %arg1: i32) -> (i32, i32, i32) {
    %c0_i32 = arith.constant 0 : i32
    %c0_i32_0 = arith.constant 0 : i32
    %c0_i32_1 = arith.constant 0 : i32
    return %arg0, %c0_i32, %c0_i32_0 : i32, i32, i32
  }
}

</mosaic_0001>

<llo_original>
// kernel: masked_mse_loss.1
$region0: #{masked_mse_loss.1}
  #allocation0 [shape = 'u32[]', space=smem, size = 0x4, offset = 0x4, fixed_abs, tag = 'smem constant byte address 0x4 - core index']
  #allocation1 [shape = 'u32[72,128]{1,0:T(1,128)}', space=vmem, size = 0x9000, scoped, tag = 'internal scratch']
  %s0 = inlined_call_operand.vmem [shape: f32[16,128], index: 0, kind: input, shape index: {}]
  %s1 = inlined_call_operand.vmem [shape: f32[16,128], index: 1, kind: input, shape index: {}]
  %s2 = inlined_call_operand.vmem [shape: f32[1,8,128], index: 2, kind: output, shape index: {0}]
  %s3 = inlined_call_operand.vmem [shape: f32[1,8,128], index: 3, kind: output, shape index: {1}]
  %4 = xla_tuple %s2, %s3
  %s5 = sld [smem:[#allocation0]]
  $region30: #{masked_mse_loss.1} parent=0
    _
  %s7 = ssub.s32 1, %s5
  %s8 = scalar_select 0, %s7, %s5
  // Predicated region
  $region2: #{masked_mse_loss.1} parent=0 // pred_check
    _
  $region3: #{masked_mse_loss.1} parent=0 // pred_check_branch
    %10 = sbr.rel (0) target = $region5
  $region4: #{masked_mse_loss.1} parent=0 // pred_region
    %s11 = sadd.s32 0, 0
    %s12 = smul.u32 2, %s11
    %p13 = scmp.lt.s32.totalorder %s12, 1
    %s14 = scalar_select %p13, %s12, 1
    %s15 = smul.addr %s14, 8
    %s16 = scalar_lea.vmem %s0, %s15
    %s17 = sadd.s32 0, 0
    %s18 = smul.u32 2, %s17
  $region5: #{masked_mse_loss.1} parent=0 // pred_fallthru
    _
  // Predicated region
  $region6: #{masked_mse_loss.1} parent=0 // pred_check
    _
  $region7: #{masked_mse_loss.1} parent=0 // pred_check_branch
    %20 = sbr.rel (0) target = $region9
  $region8: #{masked_mse_loss.1} parent=0 // pred_region
    %s21 = sadd.s32 0, 0
    %s22 = smul.u32 2, %s21
    %p23 = scmp.lt.s32.totalorder %s22, 1
    %s24 = scalar_select %p23, %s22, 1
    %s25 = smul.addr %s24, 8
    %s26 = scalar_lea.vmem %s1, %s25
    %s27 = sadd.s32 0, 0
    %s28 = smul.u32 2, %s27
  $region9: #{masked_mse_loss.1} parent=0 // pred_fallthru
    _
  %s29 = sadd.s32 0, 0
  %s30 = smul.u32 2, %s29
  %p31 = scmp.lt.s32.totalorder %s30, 1
  %s32 = scalar_select %p31, %s30, 1
  %s33 = smul.addr %s32, 8
  %s34 = scalar_lea.vmem %s0, %s33
  %s35 = sadd.s32 0, 0
  %s36 = smul.u32 2, %s35
  %p37 = scmp.lt.s32.totalorder %s36, 1
  %s38 = scalar_select %p37, %s36, 1
  %s39 = smul.addr %s38, 8
  %s40 = scalar_lea.vmem %s1, %s39
  %s41 = sadd.s32 0, 0
  %s42 = smul.u32 2, %s41
  %p43 = scmp.lt.s32.totalorder %s42, 1
  %s44 = scalar_select %p43, %s42, 1
  %s45 = smul.addr %s44, 8
  %s46 = scalar_lea.vmem %s0, %s45
  %s47 = sadd.s32 0, 0
  %s48 = smul.u32 2, %s47
  %s49 = sadd.s32 0, 0
  %s50 = smul.u32 2, %s49
  %p51 = scmp.lt.s32.totalorder %s50, 1
  %s52 = scalar_select %p51, %s50, 1
  %s53 = smul.addr %s52, 8
  %s54 = scalar_lea.vmem %s1, %s53
  %s55 = sadd.s32 0, 0
  %s56 = smul.u32 2, %s55
  %p57 = scmp.eq.s32.totalorder 0, 0
  // Predicated region
  $region10: #{masked_mse_loss.1} parent=0 // pred_check
    %p58 = pneg %p57
  $region11: #{masked_mse_loss.1} parent=0 // pred_check_branch
    %60 = sbr.rel (%p58) target = $region13
  $region12: #{masked_mse_loss.1} parent=0 // pred_region
    %61 = vst [vmem:[%s2] sm:$0xff] 0.0
    %62 = vst [vmem:[%s3] sm:$0xff] 0.0
  $region13: #{masked_mse_loss.1} parent=0 // pred_fallthru
    _
  %v63 = vld [vmem:[%s54] sm:$0xff]
  %v64 = vld [vmem:[%s54 + $0x8] sm:$0xff]
  %v65 = vld [vmem:[%s46] sm:$0xff]
  %v66 = vld [vmem:[%s46 + $0x8] sm:$0xff]
  %s67 = sadd.s32 0, 0
  %v68 = vlaneseq
  %v69 = vshrl.u32 %v68, 7
  %v70 = vadd.s32 %v69, 8
  %s71 = smul.u32 %s67, 16
  %v72 = vstv %s71
  %v73 = vadd.s32 %v72, %v69
  %v74 = vadd.s32 %v72, %v70
  %vm75 = vcmp.lt.s32.totalorder %v73, 16
  %vm76 = vcmp.lt.s32.totalorder %v74, 16
  %vm77 = vcmp.gt.f32.partialorder %v63, 0.0
  %vm78 = vcmp.gt.f32.partialorder %v64, 0.0
  %vm79 = vmand %vm75, %vm77
  %vm80 = vmand %vm76, %vm78
  %v81 = vsub.f32 %v63, %v65
  %v82 = vsub.f32 %v64, %v66
  %v83 = vsel %vm79, %v81, 0.0
  %v84 = vsel %vm80, %v82, 0.0
  %v85 = vmul.f32 %v83, %v83
  %v86 = vmul.f32 %v84, %v84
  %v87 = vsel %vm79, 1, 0
  %v88 = vsel %vm80, 1, 0
  %v89 = vcvt.s32.f32 %v87
  %v90 = vcvt.s32.f32 %v88
  %v91 = vld [vmem:[%s2] sm:$0xff]
  %v92 = vadd.f32 %v85, %v86
  %v93 = vadd.f32 %v91, %v92
  %94 = vst [vmem:[%s2] sm:$0xff] %v93
  %v95 = vld [vmem:[%s3] sm:$0xff]
  %v96 = vadd.f32 %v89, %v90
  %v97 = vadd.f32 %v95, %v96
  %98 = vst [vmem:[%s3] sm:$0xff] %v97
  // Predicated region
  $region14: #{masked_mse_loss.1} parent=0 // pred_check
    _
  $region15: #{masked_mse_loss.1} parent=0 // pred_check_branch
    %100 = sbr.rel (0) target = $region17
  $region16: #{masked_mse_loss.1} parent=0 // pred_region
    _
  $region17: #{masked_mse_loss.1} parent=0 // pred_fallthru
    _
  // Predicated region
  $region18: #{masked_mse_loss.1} parent=0 // pred_check
    _
  $region19: #{masked_mse_loss.1} parent=0 // pred_check_branch
    %102 = sbr.rel (0) target = $region21
  $region20: #{masked_mse_loss.1} parent=0 // pred_region
    _
  $region21: #{masked_mse_loss.1} parent=0 // pred_fallthru
    _
  // Predicated region
  $region22: #{masked_mse_loss.1} parent=0 // pred_check
    _
  $region23: #{masked_mse_loss.1} parent=0 // pred_check_branch
    %104 = sbr.rel (0) target = $region25
  $region24: #{masked_mse_loss.1} parent=0 // pred_region
    _
  $region25: #{masked_mse_loss.1} parent=0 // pred_fallthru
    _
  // Predicated region
  $region26: #{masked_mse_loss.1} parent=0 // pred_check
    _
  $region27: #{masked_mse_loss.1} parent=0 // pred_check_branch
    %106 = sbr.rel (0) target = $region29
  $region28: #{masked_mse_loss.1} parent=0 // pred_region
    _
  $region29: #{masked_mse_loss.1} parent=0 // pred_fallthru
    _

</llo_original>
